<compile_context>
chip_gen: v5e
topology: v5e:2x2
jax: 0.10.0
libtpu: 0.0.40
codegen_flags: <defaults>
</compile_context>

<pallas_src>
import functools

import jax
import jax.numpy as jnp
from jax.experimental import pallas as pl
from jax.experimental.pallas import tpu as pltpu


def _round_up(x, m):
    return ((x + m - 1) // m) * m


# --------------------------------------------------------------------------
# Fused small-problem kernel: whole [B, C, L] resident in VMEM, single pass.
# --------------------------------------------------------------------------
def _fused_bn_kernel(x_ref, gamma_ref, beta_ref, o_ref, *, inv_n, eps):
    x = x_ref[...].astype(jnp.float32)                     # [B, C, L]
    s = jnp.sum(x, axis=0, keepdims=True)                  # [1, C, L]
    mean = jnp.sum(s, axis=2, keepdims=True) * inv_n       # [1, C, 1]
    d = x - mean
    dsq = jnp.sum(d * d, axis=0, keepdims=True)
    var = jnp.sum(dsq, axis=2, keepdims=True) * inv_n      # biased, two-pass
    scale = gamma_ref[...] * jax.lax.rsqrt(var + eps)      # [1, C, 1]
    o_ref[...] = (d * scale + beta_ref[...]).astype(o_ref.dtype)


# --------------------------------------------------------------------------
# Tiled path, pass 1: per-channel batch statistics -> packed (scale, shift).
# --------------------------------------------------------------------------
def _stats_kernel(x_ref, gamma_ref, beta_ref, ss_ref, sum_acc, sq_acc,
                  *, inv_n, eps, n_groups):
    b = pl.program_id(0)
    li = pl.program_id(1)

    @pl.when(jnp.logical_and(b == 0, li == 0))
    def _init():
        sum_acc[...] = jnp.zeros_like(sum_acc)
        sq_acc[...] = jnp.zeros_like(sq_acc)

    # x_ref: [C, L_tile].  Accumulate per-lane-column partial sums with pure
    # VPU adds; the cross-lane (XLU) reduction is deferred to the finalize.
    for j in range(n_groups):
        xs = x_ref[:, j * 128:(j + 1) * 128].astype(jnp.float32)
        sum_acc[...] += xs
        sq_acc[...] += xs * xs

    @pl.when(jnp.logical_and(b == pl.num_programs(0) - 1,
                             li == pl.num_programs(1) - 1))
    def _finalize():
        s = jnp.sum(sum_acc[...], axis=1, keepdims=True)        # [C, 1]
        sq = jnp.sum(sq_acc[...], axis=1, keepdims=True)        # [C, 1]
        mean = s * inv_n
        # TODO(synk): E[x^2]-E[x]^2 in f32 can lose precision for |mean|>>std;
        # acceptable here (clamped), use a shifted/two-pass variant if needed.
        var = jnp.maximum(sq * inv_n - mean * mean, 0.0)        # biased var
        scale = gamma_ref[...] * jax.lax.rsqrt(var + eps)
        ss_ref[0] = scale
        ss_ref[1] = beta_ref[...] - mean * scale


# --------------------------------------------------------------------------
# Tiled path, pass 2: y = x * scale + shift (scale/shift packed as (2, C, 1)).
# --------------------------------------------------------------------------
def _affine_kernel(x_ref, ss_ref, o_ref):
    x = x_ref[...].astype(jnp.float32)                          # [C, L_tile]
    o_ref[...] = (x * ss_ref[0] + ss_ref[1]).astype(o_ref.dtype)


# --------------------------------------------------------------------------
# Wrapper
# --------------------------------------------------------------------------
def batch_normalizer_3d_forward(states, history, params, eps=1e-5,
                                max_fused_bytes=2 * 1024 * 1024):
    """Pallas-backed BatchNormalizer3D.forward.

    states:  [B, ...] with prod(...) divisible by C
    history: passed through unchanged
    params:  (gamma[C], beta[C], running_mean[C], running_var[C])
    returns: (normalized states with the same shape, history)
    """
    gamma, beta, running_mean, running_var = params
    full_shape = states.shape
    B = full_shape[0]
    C = gamma.shape[0]

    x3 = states.reshape(B, C, -1)                                # [B, C, L]
    L = x3.shape[2]
    N = B * L
    out_dtype = states.dtype
    xb = jnp.dtype(states.dtype).itemsize
    ob = xb

    gamma_col = gamma.astype(jnp.float32).reshape(C, 1)
    beta_col = beta.astype(jnp.float32).reshape(C, 1)

    # ---------------- fused fast path (training, fits in VMEM) --------------
    if B > 1 and B * C * L * 4 <= max_fused_bytes:
        out3 = pl.pallas_call(
            functools.partial(_fused_bn_kernel, inv_n=1.0 / N, eps=eps),
            out_shape=jax.ShapeDtypeStruct((B, C, L), out_dtype),
            compiler_params=pltpu.CompilerParams(
                vmem_limit_bytes=32 * 1024 * 1024),
        )(x3, gamma_col.reshape(1, C, 1), beta_col.reshape(1, C, 1))
        return out3.reshape(full_shape), history

    # ---------------- tiled path --------------------------------------------
    # L tile from a VMEM budget: double-buffered input + output tiles ~8 MiB.
    per_col_bytes = C * 2 * (xb + ob)
    tile_budget = 8 * 1024 * 1024
    max_lanes = max(128, (tile_budget // per_col_bytes) // 128 * 128)
    L_tile = int(min(_round_up(L, 128), max_lanes, 4096))
    Lp = _round_up(L, L_tile)
    n_l = Lp // L_tile

    xp = x3 if Lp == L else jnp.pad(x3, ((0, 0), (0, 0), (0, Lp - L)))

    live_bytes = (C * L_tile * 2 * (xb + ob)       # double-buffered x + out
                  + 2 * C * 128 * 4                # stats accumulators
                  + 4 * C * 4)                     # gamma/beta/scale/shift
    vmem_limit = int(min(max(live_bytes * 2, 16 * 1024 * 1024),
                         56 * 1024 * 1024))

    if B > 1:
        # Training branch: batch statistics over (B, L).
        ss = pl.pallas_call(
            functools.partial(_stats_kernel, inv_n=1.0 / N, eps=eps,
                              n_groups=L_tile // 128),
            out_shape=jax.ShapeDtypeStruct((2, C, 1), jnp.float32),
            grid=(B, n_l),
            in_specs=[
                pl.BlockSpec((None, C, L_tile), lambda b, l: (b, 0, l)),
                pl.BlockSpec((C, 1), lambda b, l: (0, 0)),   # gamma resident
                pl.BlockSpec((C, 1), lambda b, l: (0, 0)),   # beta  resident
            ],
            out_specs=pl.BlockSpec((2, C, 1), lambda b, l: (0, 0, 0)),
            scratch_shapes=[pltpu.VMEM((C, 128), jnp.float32),
                            pltpu.VMEM((C, 128), jnp.float32)],
            compiler_params=pltpu.CompilerParams(
                dimension_semantics=("arbitrary", "arbitrary"),
                vmem_limit_bytes=vmem_limit),
        )(xp, gamma_col, beta_col)
    else:
        # B == 1: torch flips to eval() -> normalize with running statistics.
        rm = running_mean.astype(jnp.float32).reshape(C, 1)
        rv = running_var.astype(jnp.float32).reshape(C, 1)
        scale = gamma_col * jax.lax.rsqrt(rv + eps)
        shift = beta_col - rm * scale
        ss = jnp.stack([scale, shift], axis=0)               # (2, C, 1)

    outp = pl.pallas_call(
        _affine_kernel,
        out_shape=jax.ShapeDtypeStruct((B, C, Lp), out_dtype),
        grid=(B, n_l),
        in_specs=[
            pl.BlockSpec((None, C, L_tile), lambda b, l: (b, 0, l)),
            pl.BlockSpec((2, C, 1), lambda b, l: (0, 0, 0)),  # packed, resident
        ],
        out_specs=pl.BlockSpec((None, C, L_tile), lambda b, l: (b, 0, l)),
        compiler_params=pltpu.CompilerParams(
            dimension_semantics=("parallel", "parallel"),
            vmem_limit_bytes=vmem_limit),
    )(xp, ss)

    out3 = outp if Lp == L else outp[:, :, :L]
    return out3.reshape(full_shape), history


# --------------------------------------------------------------------------
# Self-test
# --------------------------------------------------------------------------
if __name__ == "__main__":
    EPS = 1e-5
    key = jax.random.PRNGKey(0)

    def reference(states, params, eps, training):
        gamma, beta, rm, rv = params
        B, C = states.shape[0], gamma.shape[0]
        x3 = states.reshape(B, C, -1)
        if training:
            mean = x3.mean(axis=(0, 2), keepdims=True)
            var = x3.var(axis=(0, 2), keepdims=True)       # biased, like torch BN
        else:
            mean = rm[None, :, None]
            var = rv[None, :, None]
        return ((x3 - mean) / jnp.sqrt(var + eps) * gamma[None, :, None]
                + beta[None, :, None]).reshape(states.shape)

    def make_case(k, B, C, H, W):
        k1, k2, k3, k4, k5 = jax.random.split(k, 5)
        states = jax.random.normal(k1, (B, C, H, W), jnp.float32) * 2.0 + 0.5
        gamma = 1.0 + 0.1 * jax.random.normal(k2, (C,), jnp.float32)
        beta = 0.1 * jax.random.normal(k3, (C,), jnp.float32)
        rm = 0.2 * jax.random.normal(k4, (C,), jnp.float32)
        rv = 1.0 + 0.1 * jax.random.uniform(k5, (C,), jnp.float32)
        return states, (gamma, beta, rm, rv)

    k1, k2 = jax.random.split(key)

    # Case 1: training path (B > 1), small -> fused single-pass kernel.
    B, C, H, W, NF = 4, 32, 16, 16, 4
    states, params = make_case(k1, B, C, H, W)
    history = jnp.zeros((B, 1, 1, NF), jnp.float32)
    out, hist_out = batch_normalizer_3d_forward(states, history, params, EPS)
    out = jax.block_until_ready(out)
    ref = reference(states, params, EPS, training=True)
    assert out.shape == states.shape and hist_out.shape == history.shape
    assert jnp.allclose(out, ref, atol=1e-4, rtol=1e-4), \
        float(jnp.max(jnp.abs(out - ref)))

    # Case 2: same problem forced onto the tiled two-pass (stats + affine) path.
    out_t, _ = batch_normalizer_3d_forward(states, history, params, EPS,
                                           max_fused_bytes=0)
    out_t = jax.block_until_ready(out_t)
    assert jnp.allclose(out_t, ref, atol=1e-4, rtol=1e-4), \
        float(jnp.max(jnp.abs(out_t - ref)))

    # Case 3: odd spatial size (L = 100, needs lane padding) on the tiled path.
    B3, C3, H3, W3 = 3, 24, 10, 10
    states3, params3 = make_case(k2, B3, C3, H3, W3)
    history3 = jnp.zeros((B3, 1, 1, NF), jnp.float32)
    out3, _ = batch_normalizer_3d_forward(states3, history3, params3, EPS,
                                          max_fused_bytes=0)
    out3 = jax.block_until_ready(out3)
    ref3 = reference(states3, params3, EPS, training=True)
    assert jnp.allclose(out3, ref3, atol=1e-4, rtol=1e-4), \
        float(jnp.max(jnp.abs(out3 - ref3)))

    # Case 4: eval path (B == 1) uses running statistics.
    s1 = states[:1]
    out1, _ = batch_normalizer_3d_forward(s1, history[:1], params, EPS)
    out1 = jax.block_until_ready(out1)
    ref1 = reference(s1, params, EPS, training=False)
    assert jnp.allclose(out1, ref1, atol=1e-4, rtol=1e-4), \
        float(jnp.max(jnp.abs(out1 - ref1)))

    print("KERNEL_OK")
</pallas_src>

<mosaic_0001>
module attributes {stable_mosaic.version = 11 : i64} {
  func.func @_fused_bn_kernel(%arg0: memref<4x32x256xf32, #tpu.memory_space<vmem>>, %arg1: memref<1x32x1xf32, #tpu.memory_space<vmem>>, %arg2: memref<1x32x1xf32, #tpu.memory_space<vmem>>, %arg3: memref<4x32x256xf32, #tpu.memory_space<vmem>>) attributes {dimension_semantics = [], scalar_prefetch = 0 : i64, scratch_operands = 0 : i64, tpu.core_type = #tpu.core_type<tc>} {
    %c0 = arith.constant 0 : index
    %c0_0 = arith.constant 0 : index
    %c0_1 = arith.constant 0 : index
    %0 = vector.load %arg0[%c0, %c0_0, %c0_1] : memref<4x32x256xf32, #tpu.memory_space<vmem>>, vector<4x32x256xf32>
    %cst = arith.constant dense<0.000000e+00> : vector<32x256xf32>
    %1 = vector.multi_reduction <add>, %0, %cst [0] : vector<4x32x256xf32> to vector<32x256xf32>
    %2 = vector.shape_cast %1 : vector<32x256xf32> to vector<1x32x256xf32>
    %cst_2 = arith.constant dense<0.000000e+00> : vector<1x32xf32>
    %3 = vector.multi_reduction <add>, %2, %cst_2 [2] : vector<1x32x256xf32> to vector<1x32xf32>
    %4 = vector.shape_cast %3 : vector<1x32xf32> to vector<1x32x1xf32>
    %cst_3 = arith.constant 9.765625E-4 : f32
    %5 = vector.broadcast %cst_3 : f32 to vector<1x32x1xf32>
    %6 = arith.mulf %4, %5 : vector<1x32x1xf32>
    %7 = vector.broadcast %6 : vector<1x32x1xf32> to vector<4x32x256xf32>
    %8 = arith.subf %0, %7 : vector<4x32x256xf32>
    %9 = arith.mulf %8, %8 : vector<4x32x256xf32>
    %cst_4 = arith.constant dense<0.000000e+00> : vector<32x256xf32>
    %10 = vector.multi_reduction <add>, %9, %cst_4 [0] : vector<4x32x256xf32> to vector<32x256xf32>
    %11 = vector.shape_cast %10 : vector<32x256xf32> to vector<1x32x256xf32>
    %cst_5 = arith.constant dense<0.000000e+00> : vector<1x32xf32>
    %12 = vector.multi_reduction <add>, %11, %cst_5 [2] : vector<1x32x256xf32> to vector<1x32xf32>
    %13 = vector.shape_cast %12 : vector<1x32xf32> to vector<1x32x1xf32>
    %cst_6 = arith.constant 9.765625E-4 : f32
    %14 = vector.broadcast %cst_6 : f32 to vector<1x32x1xf32>
    %15 = arith.mulf %13, %14 : vector<1x32x1xf32>
    %c0_7 = arith.constant 0 : index
    %c0_8 = arith.constant 0 : index
    %c0_9 = arith.constant 0 : index
    %16 = vector.load %arg1[%c0_7, %c0_8, %c0_9] : memref<1x32x1xf32, #tpu.memory_space<vmem>>, vector<1x32x1xf32>
    %cst_10 = arith.constant 9.99999974E-6 : f32
    %17 = vector.broadcast %cst_10 : f32 to vector<1x32x1xf32>
    %18 = arith.addf %15, %17 : vector<1x32x1xf32>
    %19 = math.rsqrt %18 : vector<1x32x1xf32>
    %20 = arith.mulf %16, %19 : vector<1x32x1xf32>
    %21 = vector.broadcast %20 : vector<1x32x1xf32> to vector<4x32x256xf32>
    %22 = arith.mulf %8, %21 : vector<4x32x256xf32>
    %c0_11 = arith.constant 0 : index
    %c0_12 = arith.constant 0 : index
    %c0_13 = arith.constant 0 : index
    %23 = vector.load %arg2[%c0_11, %c0_12, %c0_13] : memref<1x32x1xf32, #tpu.memory_space<vmem>>, vector<1x32x1xf32>
    %24 = vector.broadcast %23 : vector<1x32x1xf32> to vector<4x32x256xf32>
    %25 = arith.addf %22, %24 : vector<4x32x256xf32>
    %c0_14 = arith.constant 0 : index
    %c0_15 = arith.constant 0 : index
    %c0_16 = arith.constant 0 : index
    %26 = vector.load %arg3[%c0_14, %c0_15, %c0_16] : memref<4x32x256xf32, #tpu.memory_space<vmem>>, vector<4x32x256xf32>
    tpu.vector_store %arg3[%c0_14, %c0_15, %c0_16], %25 {strides = array<i32>} : memref<4x32x256xf32, #tpu.memory_space<vmem>>, vector<4x32x256xf32>,
    return
  }
}

</mosaic_0001>

<llo_original>
// kernel: tpu_custom_call.1
$region0: #{tpu_custom_call.1}
  #allocation0 [shape = 'u32[]', space=smem, size = 0x4, offset = 0x4, fixed_abs, tag = 'smem constant byte address 0x4 - core index']
  #allocation1 [shape = 'u32[72,128]{1,0:T(1,128)}', space=vmem, size = 0x9000, scoped, tag = 'internal scratch']
  %s0 = inlined_call_operand.hbm [shape: f32[4,32,256], index: 0, kind: input, shape index: {}]
  %s1 = inlined_call_operand.vmem [shape: f32[1,32,1], index: 1, kind: input, shape index: {}]
  %s2 = inlined_call_operand.vmem [shape: f32[1,32,1], index: 2, kind: input, shape index: {}]
  %s3 = inlined_call_operand.hbm [shape: f32[4,32,256], index: 3, kind: output, shape index: {}]
  %s4 = sld [smem:[#allocation0]]
  $region26: #{tpu_custom_call.1} parent=0
    _
  %s6 = ssub.s32 1, %s4
  %s7 = scalar_select 0, %s6, %s4
  $region1: #{tpu_custom_call.1} parent=0
    #allocation2 [shape = 'u8[131072]{0}', space=vmem, size = 0x20000, scoped, tag = 'input window, operand 0, single buffered']
    #allocation3 [shape = 's32[1]{0}', space=sflag, size = 0x4, scoped, tag = 'scoped memory for tpu_custom_call.1']
    #allocation4 [shape = 's32[1]{0}', space=sflag, size = 0x4, scoped, tag = 'scoped memory for tpu_custom_call.1']
    #allocation5 [shape = 'u8[131072]{0}', space=vmem, size = 0x20000, scoped, tag = 'output window, operand 0, single buffered']
    %8 = vsyncpa [#allocation3], 0
    %9 = vsyncpa [#allocation4], 0
    // Predicated region
    $region2: #{tpu_custom_call.1} parent=1 // pred_check
      _
    $region3: #{tpu_custom_call.1} parent=1 // pred_check_branch
      %11 = sbr.rel (0) target = $region5
    $region4: #{tpu_custom_call.1} parent=1 // pred_region
      %13 = vsyncadd [#allocation3], 0
      %s14 = sshll.u32 %s0, 4
      %s15 = int_to_ptr.hbm [resolvable:$true] %s14
      %s16 = sshll.u32 [#allocation2], 4
      %s17 = int_to_ptr.vmem [resolvable:$true] %s16
      %22 = dma.hbm_to_vmem [thread:$0]  %s15, 4096, %s17, [#allocation3], 256, 256, 16
    $region5: #{tpu_custom_call.1} parent=1 // pred_fallthru
      _
    // Predicated region
    $region6: #{tpu_custom_call.1} parent=1 // pred_check
      _
    $region7: #{tpu_custom_call.1} parent=1 // pred_check_branch
      %24 = sbr.rel (0) target = $region9
    $region8: #{tpu_custom_call.1} parent=1 // pred_region
      _
    $region9: #{tpu_custom_call.1} parent=1 // pred_fallthru
      _
    // Predicated region
    $region10: #{tpu_custom_call.1} parent=1 // pred_check
      _
    $region11: #{tpu_custom_call.1} parent=1 // pred_check_branch
      %26 = sbr.rel (0) target = $region13
    $region12: #{tpu_custom_call.1} parent=1 // pred_region
      _
    $region13: #{tpu_custom_call.1} parent=1 // pred_fallthru
      _
    // Predicated region
    $region14: #{tpu_custom_call.1} parent=1 // pred_check
      _
    $region15: #{tpu_custom_call.1} parent=1 // pred_check_branch
      %28 = sbr.rel (0) target = $region17
    $region16: #{tpu_custom_call.1} parent=1 // pred_region
      %30 = dma.done [#allocation3], 4096
    $region17: #{tpu_custom_call.1} parent=1 // pred_fallthru
      _
    %v31 = vld [vmem:[#allocation2] sm:$0xff]
    %v32 = vld [vmem:[#allocation2 + $0x8] sm:$0xff]
    %v33 = vld [vmem:[#allocation2 + $0x10] sm:$0xff]
    %v34 = vld [vmem:[#allocation2 + $0x18] sm:$0xff]
    %v35 = vld [vmem:[#allocation2 + $0x20] sm:$0xff]
    %v36 = vld [vmem:[#allocation2 + $0x28] sm:$0xff]
    %v37 = vld [vmem:[#allocation2 + $0x30] sm:$0xff]
    %v38 = vld [vmem:[#allocation2 + $0x38] sm:$0xff]
    %v39 = vld [vmem:[#allocation2 + $0x40] sm:$0xff]
    %v40 = vld [vmem:[#allocation2 + $0x48] sm:$0xff]
    %v41 = vld [vmem:[#allocation2 + $0x50] sm:$0xff]
    %v42 = vld [vmem:[#allocation2 + $0x58] sm:$0xff]
    %v43 = vld [vmem:[#allocation2 + $0x60] sm:$0xff]
    %v44 = vld [vmem:[#allocation2 + $0x68] sm:$0xff]
    %v45 = vld [vmem:[#allocation2 + $0x70] sm:$0xff]
    %v46 = vld [vmem:[#allocation2 + $0x78] sm:$0xff]
    %v47 = vld [vmem:[#allocation2 + $0x80] sm:$0xff]
    %v48 = vld [vmem:[#allocation2 + $0x88] sm:$0xff]
    %v49 = vld [vmem:[#allocation2 + $0x90] sm:$0xff]
    %v50 = vld [vmem:[#allocation2 + $0x98] sm:$0xff]
    %v51 = vld [vmem:[#allocation2 + $0xa0] sm:$0xff]
    %v52 = vld [vmem:[#allocation2 + $0xa8] sm:$0xff]
    %v53 = vld [vmem:[#allocation2 + $0xb0] sm:$0xff]
    %v54 = vld [vmem:[#allocation2 + $0xb8] sm:$0xff]
    %v55 = vld [vmem:[#allocation2 + $0xc0] sm:$0xff]
    %v56 = vld [vmem:[#allocation2 + $0xc8] sm:$0xff]
    %v57 = vld [vmem:[#allocation2 + $0xd0] sm:$0xff]
    %v58 = vld [vmem:[#allocation2 + $0xd8] sm:$0xff]
    %v59 = vld [vmem:[#allocation2 + $0xe0] sm:$0xff]
    %v60 = vld [vmem:[#allocation2 + $0xe8] sm:$0xff]
    %v61 = vld [vmem:[#allocation2 + $0xf0] sm:$0xff]
    %v62 = vld [vmem:[#allocation2 + $0xf8] sm:$0xff]
    %v63 = vadd.f32 %v31, %v39
    %v64 = vadd.f32 %v63, %v47
    %v65 = vadd.f32 %v64, %v55
    %v66 = vadd.f32 %v32, %v40
    %v67 = vadd.f32 %v66, %v48
    %v68 = vadd.f32 %v67, %v56
    %v69 = vadd.f32 %v33, %v41
    %v70 = vadd.f32 %v69, %v49
    %v71 = vadd.f32 %v70, %v57
    %v72 = vadd.f32 %v34, %v42
    %v73 = vadd.f32 %v72, %v50
    %v74 = vadd.f32 %v73, %v58
    %v75 = vadd.f32 %v35, %v43
    %v76 = vadd.f32 %v75, %v51
    %v77 = vadd.f32 %v76, %v59
    %v78 = vadd.f32 %v36, %v44
    %v79 = vadd.f32 %v78, %v52
    %v80 = vadd.f32 %v79, %v60
    %v81 = vadd.f32 %v37, %v45
    %v82 = vadd.f32 %v81, %v53
    %v83 = vadd.f32 %v82, %v61
    %v84 = vadd.f32 %v38, %v46
    %v85 = vadd.f32 %v84, %v54
    %v86 = vadd.f32 %v85, %v62
    %v87 = vadd.f32 %v65, %v68
    %88 = vadd.xlane.f32.xlu0 %v87
    %v89 = vpop.xlane.xlu0 %88
    %v90 = vadd.f32 %v71, %v74
    %91 = vadd.xlane.f32.xlu0 %v90
    %v92 = vpop.xlane.xlu0 %91
    %v93 = vadd.f32 %v77, %v80
    %94 = vadd.xlane.f32.xlu0 %v93
    %v95 = vpop.xlane.xlu0 %94
    %v96 = vadd.f32 %v83, %v86
    %97 = vadd.xlane.f32.xlu0 %v96
    %v98 = vpop.xlane.xlu0 %97
    %v99 = vmul.f32 %v89, 0.0009765625
    %v100 = vmul.f32 %v92, 0.0009765625
    %v101 = vmul.f32 %v95, 0.0009765625
    %v102 = vmul.f32 %v98, 0.0009765625
    %v103 = vsub.f32 %v31, %v99
    %v104 = vsub.f32 %v32, %v99
    %v105 = vsub.f32 %v33, %v100
    %v106 = vsub.f32 %v34, %v100
    %v107 = vsub.f32 %v35, %v101
    %v108 = vsub.f32 %v36, %v101
    %v109 = vsub.f32 %v37, %v102
    %v110 = vsub.f32 %v38, %v102
    %v111 = vsub.f32 %v39, %v99
    %v112 = vsub.f32 %v40, %v99
    %v113 = vsub.f32 %v41, %v100
    %v114 = vsub.f32 %v42, %v100
    %v115 = vsub.f32 %v43, %v101
    %v116 = vsub.f32 %v44, %v101
    %v117 = vsub.f32 %v45, %v102
    %v118 = vsub.f32 %v46, %v102
    %v119 = vsub.f32 %v47, %v99
    %v120 = vsub.f32 %v48, %v99
    %v121 = vsub.f32 %v49, %v100
    %v122 = vsub.f32 %v50, %v100
    %v123 = vsub.f32 %v51, %v101
    %v124 = vsub.f32 %v52, %v101
    %v125 = vsub.f32 %v53, %v102
    %v126 = vsub.f32 %v54, %v102
    %v127 = vsub.f32 %v55, %v99
    %v128 = vsub.f32 %v56, %v99
    %v129 = vsub.f32 %v57, %v100
    %v130 = vsub.f32 %v58, %v100
    %v131 = vsub.f32 %v59, %v101
    %v132 = vsub.f32 %v60, %v101
    %v133 = vsub.f32 %v61, %v102
    %v134 = vsub.f32 %v62, %v102
    %v135 = vmul.f32 %v103, %v103
    %v136 = vmul.f32 %v104, %v104
    %v137 = vmul.f32 %v105, %v105
    %v138 = vmul.f32 %v106, %v106
    %v139 = vmul.f32 %v107, %v107
    %v140 = vmul.f32 %v108, %v108
    %v141 = vmul.f32 %v109, %v109
    %v142 = vmul.f32 %v110, %v110
    %v143 = vmul.f32 %v111, %v111
    %v144 = vmul.f32 %v112, %v112
    %v145 = vmul.f32 %v113, %v113
    %v146 = vmul.f32 %v114, %v114
    %v147 = vmul.f32 %v115, %v115
    %v148 = vmul.f32 %v116, %v116
    %v149 = vmul.f32 %v117, %v117
    %v150 = vmul.f32 %v118, %v118
    %v151 = vmul.f32 %v119, %v119
    %v152 = vmul.f32 %v120, %v120
    %v153 = vmul.f32 %v121, %v121
    %v154 = vmul.f32 %v122, %v122
    %v155 = vmul.f32 %v123, %v123
    %v156 = vmul.f32 %v124, %v124
    %v157 = vmul.f32 %v125, %v125
    %v158 = vmul.f32 %v126, %v126
    %v159 = vmul.f32 %v127, %v127
    %v160 = vmul.f32 %v128, %v128
    %v161 = vmul.f32 %v129, %v129
    %v162 = vmul.f32 %v130, %v130
    %v163 = vmul.f32 %v131, %v131
    %v164 = vmul.f32 %v132, %v132
    %v165 = vmul.f32 %v133, %v133
    %v166 = vmul.f32 %v134, %v134
    %v167 = vadd.f32 %v135, %v143
    %v168 = vadd.f32 %v167, %v151
    %v169 = vadd.f32 %v168, %v159
    %v170 = vadd.f32 %v136, %v144
    %v171 = vadd.f32 %v170, %v152
    %v172 = vadd.f32 %v171, %v160
    %v173 = vadd.f32 %v137, %v145
    %v174 = vadd.f32 %v173, %v153
    %v175 = vadd.f32 %v174, %v161
    %v176 = vadd.f32 %v138, %v146
    %v177 = vadd.f32 %v176, %v154
    %v178 = vadd.f32 %v177, %v162
    %v179 = vadd.f32 %v139, %v147
    %v180 = vadd.f32 %v179, %v155
    %v181 = vadd.f32 %v180, %v163
    %v182 = vadd.f32 %v140, %v148
    %v183 = vadd.f32 %v182, %v156
    %v184 = vadd.f32 %v183, %v164
    %v185 = vadd.f32 %v141, %v149
    %v186 = vadd.f32 %v185, %v157
    %v187 = vadd.f32 %v186, %v165
    %v188 = vadd.f32 %v142, %v150
    %v189 = vadd.f32 %v188, %v158
    %v190 = vadd.f32 %v189, %v166
    %v191 = vadd.f32 %v169, %v172
    %192 = vadd.xlane.f32.xlu0 %v191
    %v193 = vpop.xlane.xlu0 %192
    %v194 = vadd.f32 %v175, %v178
    %195 = vadd.xlane.f32.xlu0 %v194
    %v196 = vpop.xlane.xlu0 %195
    %v197 = vadd.f32 %v181, %v184
    %198 = vadd.xlane.f32.xlu0 %v197
    %v199 = vpop.xlane.xlu0 %198
    %v200 = vadd.f32 %v187, %v190
    %201 = vadd.xlane.f32.xlu0 %v200
    %v202 = vpop.xlane.xlu0 %201
    %v203 = vmul.f32 %v193, 0.0009765625
    %v204 = vmul.f32 %v196, 0.0009765625
    %v205 = vmul.f32 %v199, 0.0009765625
    %v206 = vmul.f32 %v202, 0.0009765625
    %v207 = vld [vmem:[%s1] sm:$0xff]
    %v208 = vld [vmem:[%s1 + $0x8] sm:$0xff]
    %v209 = vld [vmem:[%s1 + $0x10] sm:$0xff]
    %v210 = vld [vmem:[%s1 + $0x18] sm:$0xff]
    %v211 = vadd.f32 %v203, 1e-05
    %v212 = vadd.f32 %v204, 1e-05
    %v213 = vadd.f32 %v205, 1e-05
    %v214 = vadd.f32 %v206, 1e-05
    %v215 = vrsqrt.pop %v211
    %v216 = vmul.f32 %v215, %v211
    %v217 = vmul.f32 %v216, %v215
    %v218 = vmul.f32 0.5, %v217
    %v219 = vsub.f32 1.5, %v218
    %v220 = vmul.f32 %v215, %v219
    %vm221 = vweird.f32 %v211
    %vm222 = vweird.f32 %v215
    %vm223 = vmor %vm221, %vm222
    %v224 = vsel %vm223, %v215, %v220
    %v225 = vrsqrt.pop %v212
    %v226 = vmul.f32 %v225, %v212
    %v227 = vmul.f32 %v226, %v225
    %v228 = vmul.f32 0.5, %v227
    %v229 = vsub.f32 1.5, %v228
    %v230 = vmul.f32 %v225, %v229
    %vm231 = vweird.f32 %v212
    %vm232 = vweird.f32 %v225
    %vm233 = vmor %vm231, %vm232
    %v234 = vsel %vm233, %v225, %v230
    %v235 = vrsqrt.pop %v213
    %v236 = vmul.f32 %v235, %v213
    %v237 = vmul.f32 %v236, %v235
    %v238 = vmul.f32 0.5, %v237
    %v239 = vsub.f32 1.5, %v238
    %v240 = vmul.f32 %v235, %v239
    %vm241 = vweird.f32 %v213
    %vm242 = vweird.f32 %v235
    %vm243 = vmor %vm241, %vm242
    %v244 = vsel %vm243, %v235, %v240
    %v245 = vrsqrt.pop %v214
    %v246 = vmul.f32 %v245, %v214
    %v247 = vmul.f32 %v246, %v245
    %v248 = vmul.f32 0.5, %v247
    %v249 = vsub.f32 1.5, %v248
    %v250 = vmul.f32 %v245, %v249
    %vm251 = vweird.f32 %v214
    %vm252 = vweird.f32 %v245
    %vm253 = vmor %vm251, %vm252
    %v254 = vsel %vm253, %v245, %v250
    %v255 = vmul.f32 %v207, %v224
    %v256 = vmul.f32 %v208, %v234
    %v257 = vmul.f32 %v209, %v244
    %v258 = vmul.f32 %v210, %v254
    %260 = vset.pattern.permute.xlu0 0
    %261 = vperm.xlu0 %260, %v255
    %v262 = vpop.permute.xlu0 %261
    %265 = vset.pattern.permute.xlu0 0
    %266 = vperm.xlu0 %265, %v256
    %v267 = vpop.permute.xlu0 %266
    %270 = vset.pattern.permute.xlu0 0
    %271 = vperm.xlu0 %270, %v257
    %v272 = vpop.permute.xlu0 %271
    %275 = vset.pattern.permute.xlu0 0
    %276 = vperm.xlu0 %275, %v258
    %v277 = vpop.permute.xlu0 %276
    %v279 = vmul.f32 %v103, %v262
    %v280 = vmul.f32 %v104, %v262
    %v281 = vmul.f32 %v105, %v267
    %v282 = vmul.f32 %v106, %v267
    %v283 = vmul.f32 %v107, %v272
    %v284 = vmul.f32 %v108, %v272
    %v285 = vmul.f32 %v109, %v277
    %v286 = vmul.f32 %v110, %v277
    %v287 = vmul.f32 %v111, %v262
    %v288 = vmul.f32 %v112, %v262
    %v289 = vmul.f32 %v113, %v267
    %v290 = vmul.f32 %v114, %v267
    %v291 = vmul.f32 %v115, %v272
    %v292 = vmul.f32 %v116, %v272
    %v293 = vmul.f32 %v117, %v277
    %v294 = vmul.f32 %v118, %v277
    %v295 = vmul.f32 %v119, %v262
    %v296 = vmul.f32 %v120, %v262
    %v297 = vmul.f32 %v121, %v267
    %v298 = vmul.f32 %v122, %v267
    %v299 = vmul.f32 %v123, %v272
    %v300 = vmul.f32 %v124, %v272
    %v301 = vmul.f32 %v125, %v277
    %v302 = vmul.f32 %v126, %v277
    %v303 = vmul.f32 %v127, %v262
    %v304 = vmul.f32 %v128, %v262
    %v305 = vmul.f32 %v129, %v267
    %v306 = vmul.f32 %v130, %v267
    %v307 = vmul.f32 %v131, %v272
    %v308 = vmul.f32 %v132, %v272
    %v309 = vmul.f32 %v133, %v277
    %v310 = vmul.f32 %v134, %v277
    %v311 = vld [vmem:[%s2] sm:$0xff]
    %v312 = vld [vmem:[%s2 + $0x8] sm:$0xff]
    %v313 = vld [vmem:[%s2 + $0x10] sm:$0xff]
    %v314 = vld [vmem:[%s2 + $0x18] sm:$0xff]
    %316 = vset.pattern.permute.xlu0 0
    %317 = vperm.xlu0 %316, %v311
    %v318 = vpop.permute.xlu0 %317
    %321 = vset.pattern.permute.xlu0 0
    %322 = vperm.xlu0 %321, %v312
    %v323 = vpop.permute.xlu0 %322
    %326 = vset.pattern.permute.xlu0 0
    %327 = vperm.xlu0 %326, %v313
    %v328 = vpop.permute.xlu0 %327
    %331 = vset.pattern.permute.xlu0 0
    %332 = vperm.xlu0 %331, %v314
    %v333 = vpop.permute.xlu0 %332
    %v335 = vadd.f32 %v279, %v318
    %v336 = vadd.f32 %v280, %v318
    %v337 = vadd.f32 %v281, %v323
    %v338 = vadd.f32 %v282, %v323
    %v339 = vadd.f32 %v283, %v328
    %v340 = vadd.f32 %v284, %v328
    %v341 = vadd.f32 %v285, %v333
    %v342 = vadd.f32 %v286, %v333
    %v343 = vadd.f32 %v287, %v318
    %v344 = vadd.f32 %v288, %v318
    %v345 = vadd.f32 %v289, %v323
    %v346 = vadd.f32 %v290, %v323
    %v347 = vadd.f32 %v291, %v328
    %v348 = vadd.f32 %v292, %v328
    %v349 = vadd.f32 %v293, %v333
    %v350 = vadd.f32 %v294, %v333
    %v351 = vadd.f32 %v295, %v318
    %v352 = vadd.f32 %v296, %v318
    %v353 = vadd.f32 %v297, %v323
    %v354 = vadd.f32 %v298, %v323
    %v355 = vadd.f32 %v299, %v328
    %v356 = vadd.f32 %v300, %v328
    %v357 = vadd.f32 %v301, %v333
    %v358 = vadd.f32 %v302, %v333
    %v359 = vadd.f32 %v303, %v318
    %v360 = vadd.f32 %v304, %v318
    %v361 = vadd.f32 %v305, %v323
    %v362 = vadd.f32 %v306, %v323
    %v363 = vadd.f32 %v307, %v328
    %v364 = vadd.f32 %v308, %v328
    %v365 = vadd.f32 %v309, %v333
    %v366 = vadd.f32 %v310, %v333
    %367 = vst [vmem:[#allocation5] sm:$0xff] %v335
    %368 = vst [vmem:[#allocation5 + $0x8] sm:$0xff] %v336
    %369 = vst [vmem:[#allocation5 + $0x10] sm:$0xff] %v337
    %370 = vst [vmem:[#allocation5 + $0x18] sm:$0xff] %v338
    %371 = vst [vmem:[#allocation5 + $0x20] sm:$0xff] %v339
    %372 = vst [vmem:[#allocation5 + $0x28] sm:$0xff] %v340
    %373 = vst [vmem:[#allocation5 + $0x30] sm:$0xff] %v341
    %374 = vst [vmem:[#allocation5 + $0x38] sm:$0xff] %v342
    %375 = vst [vmem:[#allocation5 + $0x40] sm:$0xff] %v343
    %376 = vst [vmem:[#allocation5 + $0x48] sm:$0xff] %v344
    %377 = vst [vmem:[#allocation5 + $0x50] sm:$0xff] %v345
    %378 = vst [vmem:[#allocation5 + $0x58] sm:$0xff] %v346
    %379 = vst [vmem:[#allocation5 + $0x60] sm:$0xff] %v347
    %380 = vst [vmem:[#allocation5 + $0x68] sm:$0xff] %v348
    %381 = vst [vmem:[#allocation5 + $0x70] sm:$0xff] %v349
    %382 = vst [vmem:[#allocation5 + $0x78] sm:$0xff] %v350
    %383 = vst [vmem:[#allocation5 + $0x80] sm:$0xff] %v351
    %384 = vst [vmem:[#allocation5 + $0x88] sm:$0xff] %v352
    %385 = vst [vmem:[#allocation5 + $0x90] sm:$0xff] %v353
    %386 = vst [vmem:[#allocation5 + $0x98] sm:$0xff] %v354
    %387 = vst [vmem:[#allocation5 + $0xa0] sm:$0xff] %v355
    %388 = vst [vmem:[#allocation5 + $0xa8] sm:$0xff] %v356
    %389 = vst [vmem:[#allocation5 + $0xb0] sm:$0xff] %v357
    %390 = vst [vmem:[#allocation5 + $0xb8] sm:$0xff] %v358
    %391 = vst [vmem:[#allocation5 + $0xc0] sm:$0xff] %v359
    %392 = vst [vmem:[#allocation5 + $0xc8] sm:$0xff] %v360
    %393 = vst [vmem:[#allocation5 + $0xd0] sm:$0xff] %v361
    %394 = vst [vmem:[#allocation5 + $0xd8] sm:$0xff] %v362
    %395 = vst [vmem:[#allocation5 + $0xe0] sm:$0xff] %v363
    %396 = vst [vmem:[#allocation5 + $0xe8] sm:$0xff] %v364
    %397 = vst [vmem:[#allocation5 + $0xf0] sm:$0xff] %v365
    %398 = vst [vmem:[#allocation5 + $0xf8] sm:$0xff] %v366
    // Predicated region
    $region18: #{tpu_custom_call.1} parent=1 // pred_check
      _
    $region19: #{tpu_custom_call.1} parent=1 // pred_check_branch
      %400 = sbr.rel (0) target = $region21
    $region20: #{tpu_custom_call.1} parent=1 // pred_region
      %402 = vsyncadd [#allocation4], 0
      %s403 = sshll.u32 [#allocation5], 4
      %s404 = int_to_ptr.vmem [resolvable:$true] %s403
      %s405 = sshll.u32 %s3, 4
      %s406 = int_to_ptr.hbm [resolvable:$true] %s405
      %411 = dma.vmem_to_hbm [thread:$0]  %s404, 4096, %s406, [#allocation4], 256, 256, 16
    $region21: #{tpu_custom_call.1} parent=1 // pred_fallthru
      _
    // Predicated region
    $region22: #{tpu_custom_call.1} parent=1 // pred_check
      _
    $region23: #{tpu_custom_call.1} parent=1 // pred_check_branch
      %413 = sbr.rel (0) target = $region25
    $region24: #{tpu_custom_call.1} parent=1 // pred_region
      %415 = dma.done [#allocation4], 4096
    $region25: #{tpu_custom_call.1} parent=1 // pred_fallthru
      _
    %416 = vsyncpa [#allocation3], 1
    %417 = vsyncpa [#allocation4], 1

</llo_original>
